<compile_context>
chip_gen: v5e
topology: v5e:2x2
jax: 0.10.0
libtpu: 0.0.40
codegen_flags: <defaults>
</compile_context>

<pallas_src>
import jax
import jax.numpy as jnp
from jax.experimental import pallas as pl
from jax.experimental.pallas import tpu as pltpu

LANE = 128          # single lane tile covers every real feature dim (<=15)
MAX_TILE_B = 2048   # batch rows per grid step; keeps live VMEM < ~6 MiB


def _round_up(n, m):
    return ((n + m - 1) // m) * m


def _mlp_kernel(x_ref, w_ref, b_ref, o_ref):
    prec = jax.lax.Precision.HIGHEST
    n_in = x_ref.shape[-1]       # real input feature width (static)
    n_out = o_ref.shape[-1]      # real output feature width (static)

    x = x_ref[...]               # (tile_b, n_in) -- lane-exact, no HBM pad
    w = w_ref[...]               # (4, 128, 128)
    b = b_ref[...]               # (4, 128)

    # linear1 + sigmoid (narrow-K dot against the n_in real weight rows)
    h = jnp.dot(x, w[0, :n_in, :],
                preferred_element_type=jnp.float32, precision=prec) + b[0:1, :]
    h = jax.nn.sigmoid(h)
    # linear2 + sigmoid (zero weight pad rows absorb sigmoid(0)=0.5 pad lanes)
    h = jnp.dot(h, w[1],
                preferred_element_type=jnp.float32, precision=prec) + b[1:2, :]
    h = jax.nn.sigmoid(h)
    # linear3 + relu
    h = jnp.dot(h, w[2],
                preferred_element_type=jnp.float32, precision=prec) + b[2:3, :]
    h = jnp.maximum(h, 0.0)
    # output layer; store only the valid output lanes
    h = jnp.dot(h, w[3],
                preferred_element_type=jnp.float32, precision=prec) + b[3:4, :]
    o_ref[...] = h[:, :n_out].astype(o_ref.dtype)


def prepare_params(params):
    """Pad + pack weights/biases ONCE (hoisted out of the per-call path).

    Returns:
      w_all: (4, 128, 128) f32 -- layer i weight at w_all[i], (in, out) layout.
      b_all: (4, 128)     f32 -- layer i bias at b_all[i].
    """
    w_list, b_list = [], []
    for i in range(1, 5):
        w = params[f"w{i}"].astype(jnp.float32)
        b = params[f"b{i}"].astype(jnp.float32)
        w_list.append(jnp.pad(w, ((0, LANE - w.shape[0]), (0, LANE - w.shape[1]))))
        b_list.append(jnp.pad(b, (0, LANE - b.shape[0])))
    return jnp.stack(w_list), jnp.stack(b_list)


def mlp_forward(x, w_all, b_all, num_outputs):
    """x: (B, num_inputs) f32.  w_all/b_all: packed padded params from prepare_params."""
    B, n_in = x.shape

    # Target 2 grid steps (keeps both v7x TensorCores busy via the "parallel"
    # axis) unless the batch is tiny; cap tile_b for VMEM (v5e 16 MiB scoped,
    # v7x 32 MiB scoped / 64 MiB physical).
    half = _round_up(max((B + 1) // 2, 1), 8)
    tile_b = max(8, min(MAX_TILE_B, half))
    Bp = _round_up(max(B, tile_b), tile_b)
    num_tiles = Bp // tile_b

    xp = x.astype(jnp.float32)
    if Bp != B:
        xp = jnp.pad(xp, ((0, Bp - B), (0, 0)))   # pad batch rows only

    out_p = pl.pallas_call(
        _mlp_kernel,
        out_shape=jax.ShapeDtypeStruct((Bp, num_outputs), jnp.float32),
        grid=(num_tiles,),
        in_specs=[
            pl.BlockSpec((tile_b, n_in), lambda i: (i, 0)),       # x: streamed, lane-exact
            pl.BlockSpec((4, LANE, LANE), lambda i: (0, 0, 0)),   # weights: VMEM-resident
            pl.BlockSpec((4, LANE), lambda i: (0, 0)),            # biases: VMEM-resident
        ],
        out_specs=pl.BlockSpec((tile_b, num_outputs), lambda i: (i, 0)),  # lane-exact output
        compiler_params=pltpu.CompilerParams(
            dimension_semantics=("parallel",)),
    )(xp, w_all, b_all)

    return out_p[:B]   # padded batch rows contain garbage -> keep the row slice


def init_params(key, num_inputs, num_outputs):
    """Deterministic init matching nn.Linear's U(-1/sqrt(fan_in), 1/sqrt(fan_in))."""
    dims = [(num_inputs, 10), (10, 15), (15, 5), (5, num_outputs)]
    params = {}
    for i, (fan_in, fan_out) in enumerate(dims, start=1):
        key, kw, kb = jax.random.split(key, 3)
        bound = 1.0 / jnp.sqrt(jnp.float32(fan_in))
        params[f"w{i}"] = jax.random.uniform(
            kw, (fan_in, fan_out), jnp.float32, -bound, bound)
        params[f"b{i}"] = jax.random.uniform(
            kb, (fan_out,), jnp.float32, -bound, bound)
    return params


def mlp_reference(x, params):
    h = jax.nn.sigmoid(x @ params["w1"] + params["b1"])
    h = jax.nn.sigmoid(h @ params["w2"] + params["b2"])
    h = jnp.maximum(h @ params["w3"] + params["b3"], 0.0)
    return h @ params["w4"] + params["b4"]


if __name__ == "__main__":
    key = jax.random.PRNGKey(0)
    k_x, k_x2, k_p = jax.random.split(key, 3)

    B, num_inputs, num_outputs = 2, 4, 3
    x = jax.random.normal(k_x, (B, num_inputs), jnp.float32)
    params = init_params(k_p, num_inputs, num_outputs)

    # Pad/pack params once, reused across every forward call.
    w_all, b_all = prepare_params(params)

    # Small-batch check (single grid step).
    out = mlp_forward(x, w_all, b_all, num_outputs)
    out = jax.block_until_ready(out)
    ref = mlp_reference(x, params)
    assert out.shape == (B, num_outputs)
    assert jnp.allclose(out, ref, atol=1e-5, rtol=1e-5), "mismatch vs JAX reference (small batch)"

    # Larger batch exercises the 2-step batch grid with VMEM-resident weights.
    B2 = 1536
    x2 = jax.random.normal(k_x2, (B2, num_inputs), jnp.float32)
    out2 = mlp_forward(x2, w_all, b_all, num_outputs)
    out2 = jax.block_until_ready(out2)
    ref2 = mlp_reference(x2, params)
    assert out2.shape == (B2, num_outputs)
    assert jnp.allclose(out2, ref2, atol=1e-5, rtol=1e-5), "mismatch vs JAX reference (large batch)"

    print("KERNEL_OK")
</pallas_src>

<mosaic_0001>
module attributes {stable_mosaic.version = 11 : i64} {
  func.func @_mlp_kernel(%arg0: i32, %arg1: memref<8x4xf32, #tpu.memory_space<vmem>>, %arg2: memref<4x128x128xf32, #tpu.memory_space<vmem>>, %arg3: memref<4x128xf32, #tpu.memory_space<vmem>>, %arg4: memref<8x3xf32, #tpu.memory_space<vmem>>) attributes {dimension_semantics = [#tpu.dimension_semantics<parallel>], iteration_bounds = array<i64: 1>, scalar_prefetch = 0 : i64, scratch_operands = 0 : i64, tpu.core_type = #tpu.core_type<tc>, window_params = [{transform_indices = @transform_0, window_bounds = array<i64: 8, 4>}, {pipeline_mode = #tpu.pipeline_mode<synchronous>, transform_indices = @transform_1, window_bounds = array<i64: 4, 128, 128>}, {pipeline_mode = #tpu.pipeline_mode<synchronous>, transform_indices = @transform_2, window_bounds = array<i64: 4, 128>}, {transform_indices = @transform_3, window_bounds = array<i64: 8, 3>}]} {
    %c0 = arith.constant 0 : index
    %c0_0 = arith.constant 0 : index
    %0 = vector.load %arg1[%c0, %c0_0] : memref<8x4xf32, #tpu.memory_space<vmem>>, vector<8x4xf32>
    %c0_1 = arith.constant 0 : index
    %c0_2 = arith.constant 0 : index
    %c0_3 = arith.constant 0 : index
    %1 = vector.load %arg2[%c0_1, %c0_2, %c0_3] : memref<4x128x128xf32, #tpu.memory_space<vmem>>, vector<4x128x128xf32>
    %c0_4 = arith.constant 0 : index
    %c0_5 = arith.constant 0 : index
    %2 = vector.load %arg3[%c0_4, %c0_5] : memref<4x128xf32, #tpu.memory_space<vmem>>, vector<4x128xf32>
    %3 = vector.extract_strided_slice %1 {offsets = [0, 0, 0], sizes = [1, 4, 128], strides = [1, 1, 1]} : vector<4x128x128xf32> to vector<1x4x128xf32>
    %4 = vector.shape_cast %3 : vector<1x4x128xf32> to vector<4x128xf32>
    %cst = arith.constant dense<0.000000e+00> : vector<8x128xf32>
    %5 = tpu.matmul %0, %4, %cst {dimension_numbers = #tpu.dot_dimension_numbers<[1], [0], [0], [1], [0, 0, 1, 1], [], []>, precision = #tpu.contract_precision<fp32>} : vector<8x4xf32>, vector<4x128xf32>, vector<8x128xf32> -> vector<8x128xf32>
    %6 = vector.extract_strided_slice %2 {offsets = [0, 0], sizes = [1, 128], strides = [1, 1]} : vector<4x128xf32> to vector<1x128xf32>
    %7 = vector.broadcast %6 : vector<1x128xf32> to vector<8x128xf32>
    %8 = arith.addf %5, %7 : vector<8x128xf32>
    %9 = arith.negf %8 : vector<8x128xf32>
    %10 = math.exp %9 : vector<8x128xf32>
    %cst_6 = arith.constant 1.000000e+00 : f32
    %11 = vector.broadcast %cst_6 : f32 to vector<8x128xf32>
    %12 = arith.addf %11, %10 : vector<8x128xf32>
    %13 = arith.divf %11, %12 : vector<8x128xf32>
    %14 = vector.extract_strided_slice %1 {offsets = [1, 0, 0], sizes = [1, 128, 128], strides = [1, 1, 1]} : vector<4x128x128xf32> to vector<1x128x128xf32>
    %15 = vector.shape_cast %14 : vector<1x128x128xf32> to vector<128x128xf32>
    %cst_7 = arith.constant dense<0.000000e+00> : vector<8x128xf32>
    %16 = tpu.matmul %13, %15, %cst_7 {dimension_numbers = #tpu.dot_dimension_numbers<[1], [0], [0], [1], [0, 0, 1, 1], [], []>, precision = #tpu.contract_precision<fp32>} : vector<8x128xf32>, vector<128x128xf32>, vector<8x128xf32> -> vector<8x128xf32>
    %17 = vector.extract_strided_slice %2 {offsets = [1, 0], sizes = [1, 128], strides = [1, 1]} : vector<4x128xf32> to vector<1x128xf32>
    %18 = vector.broadcast %17 : vector<1x128xf32> to vector<8x128xf32>
    %19 = arith.addf %16, %18 : vector<8x128xf32>
    %20 = arith.negf %19 : vector<8x128xf32>
    %21 = math.exp %20 : vector<8x128xf32>
    %cst_8 = arith.constant 1.000000e+00 : f32
    %22 = vector.broadcast %cst_8 : f32 to vector<8x128xf32>
    %23 = arith.addf %22, %21 : vector<8x128xf32>
    %24 = arith.divf %22, %23 : vector<8x128xf32>
    %25 = vector.extract_strided_slice %1 {offsets = [2, 0, 0], sizes = [1, 128, 128], strides = [1, 1, 1]} : vector<4x128x128xf32> to vector<1x128x128xf32>
    %26 = vector.shape_cast %25 : vector<1x128x128xf32> to vector<128x128xf32>
    %cst_9 = arith.constant dense<0.000000e+00> : vector<8x128xf32>
    %27 = tpu.matmul %24, %26, %cst_9 {dimension_numbers = #tpu.dot_dimension_numbers<[1], [0], [0], [1], [0, 0, 1, 1], [], []>, precision = #tpu.contract_precision<fp32>} : vector<8x128xf32>, vector<128x128xf32>, vector<8x128xf32> -> vector<8x128xf32>
    %28 = vector.extract_strided_slice %2 {offsets = [2, 0], sizes = [1, 128], strides = [1, 1]} : vector<4x128xf32> to vector<1x128xf32>
    %29 = vector.broadcast %28 : vector<1x128xf32> to vector<8x128xf32>
    %30 = arith.addf %27, %29 : vector<8x128xf32>
    %cst_10 = arith.constant 0.000000e+00 : f32
    %31 = vector.broadcast %cst_10 : f32 to vector<8x128xf32>
    %32 = arith.maximumf %30, %31 : vector<8x128xf32>
    %33 = vector.extract_strided_slice %1 {offsets = [3, 0, 0], sizes = [1, 128, 128], strides = [1, 1, 1]} : vector<4x128x128xf32> to vector<1x128x128xf32>
    %34 = vector.shape_cast %33 : vector<1x128x128xf32> to vector<128x128xf32>
    %cst_11 = arith.constant dense<0.000000e+00> : vector<8x128xf32>
    %35 = tpu.matmul %32, %34, %cst_11 {dimension_numbers = #tpu.dot_dimension_numbers<[1], [0], [0], [1], [0, 0, 1, 1], [], []>, precision = #tpu.contract_precision<fp32>} : vector<8x128xf32>, vector<128x128xf32>, vector<8x128xf32> -> vector<8x128xf32>
    %36 = vector.extract_strided_slice %2 {offsets = [3, 0], sizes = [1, 128], strides = [1, 1]} : vector<4x128xf32> to vector<1x128xf32>
    %37 = vector.broadcast %36 : vector<1x128xf32> to vector<8x128xf32>
    %38 = arith.addf %35, %37 : vector<8x128xf32>
    %39 = vector.extract_strided_slice %38 {offsets = [0, 0], sizes = [8, 3], strides = [1, 1]} : vector<8x128xf32> to vector<8x3xf32>
    %c0_12 = arith.constant 0 : index
    %c0_13 = arith.constant 0 : index
    %40 = vector.load %arg4[%c0_12, %c0_13] : memref<8x3xf32, #tpu.memory_space<vmem>>, vector<8x3xf32>
    tpu.vector_store %arg4[%c0_12, %c0_13], %39 {strides = array<i32>} : memref<8x3xf32, #tpu.memory_space<vmem>>, vector<8x3xf32>,
    return
  }
  func.func @transform_0(%arg0: i32) -> (i32, i32) {
    %c0_i32 = arith.constant 0 : i32
    %c0_i32_0 = arith.constant 0 : i32
    return %arg0, %c0_i32 : i32, i32
  }
  func.func @transform_1(%arg0: i32) -> (i32, i32, i32) {
    %c0_i32 = arith.constant 0 : i32
    %c0_i32_0 = arith.constant 0 : i32
    %c0_i32_1 = arith.constant 0 : i32
    %c0_i32_2 = arith.constant 0 : i32
    return %c0_i32, %c0_i32_0, %c0_i32_1 : i32, i32, i32
  }
  func.func @transform_2(%arg0: i32) -> (i32, i32) {
    %c0_i32 = arith.constant 0 : i32
    %c0_i32_0 = arith.constant 0 : i32
    %c0_i32_1 = arith.constant 0 : i32
    return %c0_i32, %c0_i32_0 : i32, i32
  }
  func.func @transform_3(%arg0: i32) -> (i32, i32) {
    %c0_i32 = arith.constant 0 : i32
    %c0_i32_0 = arith.constant 0 : i32
    return %arg0, %c0_i32 : i32, i32
  }
}

</mosaic_0001>

<llo_original>
// kernel: tpu_custom_call.1
$region0: #{tpu_custom_call.1}
  #allocation0 [shape = 'u32[]', space=smem, size = 0x4, offset = 0x4, fixed_abs, tag = 'smem constant byte address 0x4 - core index']
  #allocation1 [shape = 'u32[72,128]{1,0:T(1,128)}', space=vmem, size = 0x9000, scoped, tag = 'internal scratch']
  %s0 = inlined_call_operand.vmem [shape: f32[8,4], index: 0, kind: input, shape index: {}]
  %s1 = inlined_call_operand.hbm [shape: f32[4,128,128], index: 1, kind: input, shape index: {}]
  %s2 = inlined_call_operand.vmem [shape: f32[4,128], index: 2, kind: input, shape index: {}]
  %s3 = inlined_call_operand.vmem [shape: f32[8,3], index: 3, kind: output, shape index: {}]
  %s4 = sld [smem:[#allocation0]]
  $region26: #{tpu_custom_call.1} parent=0
    _
  %s6 = ssub.s32 1, %s4
  %s7 = scalar_select 0, %s6, %s4
  $region1: #{tpu_custom_call.1} parent=0
    #allocation2 [shape = 'u8[262144]{0}', space=vmem, size = 0x40000, scoped, tag = 'input window, operand 1, single buffered']
    #allocation3 [shape = 's32[1]{0}', space=sflag, size = 0x4, scoped, tag = 'scoped memory for tpu_custom_call.1']
    %8 = vsyncpa [#allocation3], 0
    // Predicated region
    $region2: #{tpu_custom_call.1} parent=1 // pred_check
      _
    $region3: #{tpu_custom_call.1} parent=1 // pred_check_branch
      %10 = sbr.rel (0) target = $region5
    $region4: #{tpu_custom_call.1} parent=1 // pred_region
      _
    $region5: #{tpu_custom_call.1} parent=1 // pred_fallthru
      _
    // Predicated region
    $region6: #{tpu_custom_call.1} parent=1 // pred_check
      _
    $region7: #{tpu_custom_call.1} parent=1 // pred_check_branch
      %12 = sbr.rel (0) target = $region9
    $region8: #{tpu_custom_call.1} parent=1 // pred_region
      %14 = vsyncadd [#allocation3], 0
      %s15 = sshll.u32 %s1, 4
      %s16 = int_to_ptr.hbm [resolvable:$true] %s15
      %s17 = sshll.u32 [#allocation2], 4
      %s18 = int_to_ptr.vmem [resolvable:$true] %s17
      %23 = dma.hbm_to_vmem [thread:$0]  %s16, 8192, %s18, [#allocation3], 128, 128, 8
    $region9: #{tpu_custom_call.1} parent=1 // pred_fallthru
      _
    // Predicated region
    $region10: #{tpu_custom_call.1} parent=1 // pred_check
      _
    $region11: #{tpu_custom_call.1} parent=1 // pred_check_branch
      %25 = sbr.rel (0) target = $region13
    $region12: #{tpu_custom_call.1} parent=1 // pred_region
      _
    $region13: #{tpu_custom_call.1} parent=1 // pred_fallthru
      _
    // Predicated region
    $region14: #{tpu_custom_call.1} parent=1 // pred_check
      _
    $region15: #{tpu_custom_call.1} parent=1 // pred_check_branch
      %27 = sbr.rel (0) target = $region17
    $region16: #{tpu_custom_call.1} parent=1 // pred_region
      %29 = dma.done [#allocation3], 8192
    $region17: #{tpu_custom_call.1} parent=1 // pred_fallthru
      _
    %v30 = vld [vmem:[%s0] sm:$0xff]
    %v31 = vld [vmem:[#allocation2] sm:$0xff]
    %v32 = vld [vmem:[#allocation2 + $0x80] sm:$0xff]
    %v33 = vld [vmem:[#allocation2 + $0x88] sm:$0xff]
    %v34 = vld [vmem:[#allocation2 + $0x90] sm:$0xff]
    %v35 = vld [vmem:[#allocation2 + $0x98] sm:$0xff]
    %v36 = vld [vmem:[#allocation2 + $0xa0] sm:$0xff]
    %v37 = vld [vmem:[#allocation2 + $0xa8] sm:$0xff]
    %v38 = vld [vmem:[#allocation2 + $0xb0] sm:$0xff]
    %v39 = vld [vmem:[#allocation2 + $0xb8] sm:$0xff]
    %v40 = vld [vmem:[#allocation2 + $0xc0] sm:$0xff]
    %v41 = vld [vmem:[#allocation2 + $0xc8] sm:$0xff]
    %v42 = vld [vmem:[#allocation2 + $0xd0] sm:$0xff]
    %v43 = vld [vmem:[#allocation2 + $0xd8] sm:$0xff]
    %v44 = vld [vmem:[#allocation2 + $0xe0] sm:$0xff]
    %v45 = vld [vmem:[#allocation2 + $0xe8] sm:$0xff]
    %v46 = vld [vmem:[#allocation2 + $0xf0] sm:$0xff]
    %v47 = vld [vmem:[#allocation2 + $0xf8] sm:$0xff]
    %v48 = vld [vmem:[#allocation2 + $0x100] sm:$0xff]
    %v49 = vld [vmem:[#allocation2 + $0x108] sm:$0xff]
    %v50 = vld [vmem:[#allocation2 + $0x110] sm:$0xff]
    %v51 = vld [vmem:[#allocation2 + $0x118] sm:$0xff]
    %v52 = vld [vmem:[#allocation2 + $0x120] sm:$0xff]
    %v53 = vld [vmem:[#allocation2 + $0x128] sm:$0xff]
    %v54 = vld [vmem:[#allocation2 + $0x130] sm:$0xff]
    %v55 = vld [vmem:[#allocation2 + $0x138] sm:$0xff]
    %v56 = vld [vmem:[#allocation2 + $0x140] sm:$0xff]
    %v57 = vld [vmem:[#allocation2 + $0x148] sm:$0xff]
    %v58 = vld [vmem:[#allocation2 + $0x150] sm:$0xff]
    %v59 = vld [vmem:[#allocation2 + $0x158] sm:$0xff]
    %v60 = vld [vmem:[#allocation2 + $0x160] sm:$0xff]
    %v61 = vld [vmem:[#allocation2 + $0x168] sm:$0xff]
    %v62 = vld [vmem:[#allocation2 + $0x170] sm:$0xff]
    %v63 = vld [vmem:[#allocation2 + $0x178] sm:$0xff]
    %v64 = vld [vmem:[#allocation2 + $0x180] sm:$0xff]
    %v65 = vld [vmem:[#allocation2 + $0x188] sm:$0xff]
    %v66 = vld [vmem:[#allocation2 + $0x190] sm:$0xff]
    %v67 = vld [vmem:[#allocation2 + $0x198] sm:$0xff]
    %v68 = vld [vmem:[#allocation2 + $0x1a0] sm:$0xff]
    %v69 = vld [vmem:[#allocation2 + $0x1a8] sm:$0xff]
    %v70 = vld [vmem:[#allocation2 + $0x1b0] sm:$0xff]
    %v71 = vld [vmem:[#allocation2 + $0x1b8] sm:$0xff]
    %v72 = vld [vmem:[#allocation2 + $0x1c0] sm:$0xff]
    %v73 = vld [vmem:[#allocation2 + $0x1c8] sm:$0xff]
    %v74 = vld [vmem:[#allocation2 + $0x1d0] sm:$0xff]
    %v75 = vld [vmem:[#allocation2 + $0x1d8] sm:$0xff]
    %v76 = vld [vmem:[#allocation2 + $0x1e0] sm:$0xff]
    %v77 = vld [vmem:[#allocation2 + $0x1e8] sm:$0xff]
    %v78 = vld [vmem:[#allocation2 + $0x1f0] sm:$0xff]
    %v79 = vld [vmem:[#allocation2 + $0x1f8] sm:$0xff]
    %v80 = vld [vmem:[%s2] sm:$0xf]
    %v81 = vperm.slane %v80, 0
    %vm82 = vcmask 31744
    %v84 = vsel %vm82, %v30, 0
    %vm86 = vcmask 1043456
    %v88 = vsel %vm86, %v31, 0
    %90 = vmatpush.msra.mxu0 0.0
    %91 = vmatpush.msra.mxu0 0.0
    %92 = vmatpush.msra.mxu0 0.0
    %93 = vmatpush.msra.mxu0 0.0
    %94 = vmatpush.msra.mxu0 0.0
    %95 = vmatpush.msra.mxu0 0.0
    %96 = vmatpush.msra.mxu0 0.0
    %97 = vmatpush.msra.mxu0 0.0
    %98 = vmatpush.msra.mxu0 0.0
    %99 = vmatpush.msra.mxu0 0.0
    %100 = vmatpush.msra.mxu0 0.0
    %101 = vmatpush.msra.mxu0 0.0
    %102 = vmatpush.msra.mxu0 0.0
    %103 = vmatpush.msra.mxu0 0.0
    %104 = vmatpush.msra.mxu0 0.0
    %v105 = vand.u32 %v88, 4294901760
    %106 = vmatpush.msra.mxu0 %v105
    %v107 = vand.u32 %v84, 4294901760
    %v108 = vsub.f32 %v84, %v107
    %v109 = vand.u32 %v108, 4294901760
    %v110 = vsub.f32 %v108, %v109
    %v111 = vand.u32 %v110, 4294901760
    %112 = vmatmul.f32.gmra.mxu0 %v111
    %v113 = vpop.f32.mrf.mxu0
    %v114 = vadd.f32 %v81, %v113
    %115 = vdwg.mxu0
    %116 = vmatpush.msra.mxu0 0.0
    %117 = vmatpush.msra.mxu0 0.0
    %118 = vmatpush.msra.mxu0 0.0
    %119 = vmatpush.msra.mxu0 0.0
    %120 = vmatpush.msra.mxu0 0.0
    %121 = vmatpush.msra.mxu0 0.0
    %122 = vmatpush.msra.mxu0 0.0
    %123 = vmatpush.msra.mxu0 0.0
    %124 = vmatpush.msra.mxu0 0.0
    %125 = vmatpush.msra.mxu0 0.0
    %126 = vmatpush.msra.mxu0 0.0
    %127 = vmatpush.msra.mxu0 0.0
    %128 = vmatpush.msra.mxu0 0.0
    %129 = vmatpush.msra.mxu0 0.0
    %130 = vmatpush.msra.mxu0 0.0
    %v131 = vand.u32 %v88, 4294901760
    %v132 = vsub.f32 %v88, %v131
    %v133 = vand.u32 %v132, 4294901760
    %v134 = vsub.f32 %v132, %v133
    %v135 = vand.u32 %v134, 4294901760
    %136 = vmatpush.msra.mxu0 %v135
    %v137 = vand.u32 %v84, 4294901760
    %138 = vmatmul.f32.gmra.mxu0 %v137
    %v139 = vpop.f32.mrf.mxu0
    %v140 = vadd.f32 %v114, %v139
    %141 = vdwg.mxu0
    %142 = vmatpush.msra.mxu0 0.0
    %143 = vmatpush.msra.mxu0 0.0
    %144 = vmatpush.msra.mxu0 0.0
    %145 = vmatpush.msra.mxu0 0.0
    %146 = vmatpush.msra.mxu0 0.0
    %147 = vmatpush.msra.mxu0 0.0
    %148 = vmatpush.msra.mxu0 0.0
    %149 = vmatpush.msra.mxu0 0.0
    %150 = vmatpush.msra.mxu0 0.0
    %151 = vmatpush.msra.mxu0 0.0
    %152 = vmatpush.msra.mxu0 0.0
    %153 = vmatpush.msra.mxu0 0.0
    %154 = vmatpush.msra.mxu0 0.0
    %155 = vmatpush.msra.mxu0 0.0
    %156 = vmatpush.msra.mxu0 0.0
    %v157 = vand.u32 %v88, 4294901760
    %v158 = vsub.f32 %v88, %v157
    %159 = vmatpush.msra.mxu0 %v158
    %v160 = vand.u32 %v84, 4294901760
    %v161 = vsub.f32 %v84, %v160
    %162 = vmatmul.f32.gmra.mxu0 %v161
    %v163 = vpop.f32.mrf.mxu0
    %v164 = vadd.f32 %v140, %v163
    %165 = vdwg.mxu0
    %166 = vmatpush.msra.mxu0 0.0
    %167 = vmatpush.msra.mxu0 0.0
    %168 = vmatpush.msra.mxu0 0.0
    %169 = vmatpush.msra.mxu0 0.0
    %170 = vmatpush.msra.mxu0 0.0
    %171 = vmatpush.msra.mxu0 0.0
    %172 = vmatpush.msra.mxu0 0.0
    %173 = vmatpush.msra.mxu0 0.0
    %174 = vmatpush.msra.mxu0 0.0
    %175 = vmatpush.msra.mxu0 0.0
    %176 = vmatpush.msra.mxu0 0.0
    %177 = vmatpush.msra.mxu0 0.0
    %178 = vmatpush.msra.mxu0 0.0
    %179 = vmatpush.msra.mxu0 0.0
    %180 = vmatpush.msra.mxu0 0.0
    %v181 = vand.u32 %v88, 4294901760
    %182 = vmatpush.msra.mxu0 %v181
    %v183 = vand.u32 %v84, 4294901760
    %v184 = vsub.f32 %v84, %v183
    %v185 = vand.u32 %v184, 4294901760
    %186 = vmatmul.f32.gmra.mxu0 %v185
    %v187 = vpop.f32.mrf.mxu0
    %v188 = vadd.f32 %v164, %v187
    %189 = vdwg.mxu0
    %190 = vmatpush.msra.mxu0 0.0
    %191 = vmatpush.msra.mxu0 0.0
    %192 = vmatpush.msra.mxu0 0.0
    %193 = vmatpush.msra.mxu0 0.0
    %194 = vmatpush.msra.mxu0 0.0
    %195 = vmatpush.msra.mxu0 0.0
    %196 = vmatpush.msra.mxu0 0.0
    %197 = vmatpush.msra.mxu0 0.0
    %198 = vmatpush.msra.mxu0 0.0
    %199 = vmatpush.msra.mxu0 0.0
    %200 = vmatpush.msra.mxu0 0.0
    %201 = vmatpush.msra.mxu0 0.0
    %202 = vmatpush.msra.mxu0 0.0
    %203 = vmatpush.msra.mxu0 0.0
    %204 = vmatpush.msra.mxu0 0.0
    %v205 = vand.u32 %v88, 4294901760
    %v206 = vsub.f32 %v88, %v205
    %v207 = vand.u32 %v206, 4294901760
    %208 = vmatpush.msra.mxu0 %v207
    %v209 = vand.u32 %v84, 4294901760
    %210 = vmatmul.f32.gmra.mxu0 %v209
    %v211 = vpop.f32.mrf.mxu0
    %v212 = vadd.f32 %v188, %v211
    %213 = vdwg.mxu0
    %214 = vmatpush.msra.mxu0 0.0
    %215 = vmatpush.msra.mxu0 0.0
    %216 = vmatpush.msra.mxu0 0.0
    %217 = vmatpush.msra.mxu0 0.0
    %218 = vmatpush.msra.mxu0 0.0
    %219 = vmatpush.msra.mxu0 0.0
    %220 = vmatpush.msra.mxu0 0.0
    %221 = vmatpush.msra.mxu0 0.0
    %222 = vmatpush.msra.mxu0 0.0
    %223 = vmatpush.msra.mxu0 0.0
    %224 = vmatpush.msra.mxu0 0.0
    %225 = vmatpush.msra.mxu0 0.0
    %226 = vmatpush.msra.mxu0 0.0
    %227 = vmatpush.msra.mxu0 0.0
    %228 = vmatpush.msra.mxu0 0.0
    %v229 = vand.u32 %v88, 4294901760
    %230 = vmatpush.msra.mxu0 %v229
    %v231 = vand.u32 %v84, 4294901760
    %232 = vmatmul.f32.gmra.mxu0 %v231
    %v233 = vpop.f32.mrf.mxu0
    %v234 = vadd.f32 %v212, %v233
    %235 = vdwg.mxu0
    %v236 = vxor.u32 %v234, 2147483648
    %v237 = vmul.f32 %v236, 1.442695
    %v238 = vpow.pop %v237
    %v239 = vadd.f32 %v238, 1.0
    %v240 = vrcp.pop %v239
    %v241 = vmul.f32 %v239, %v240
    %v242 = vsub.f32 1.0, %v241
    %v243 = vmul.f32 %v240, %v242
    %v244 = vadd.f32 %v240, %v243
    %vm245 = vweird.f32 %v239
    %vm246 = vweird.f32 %v240
    %vm247 = vmor %vm245, %vm246
    %v248 = vsel %vm247, %v240, %v244
    %v249 = vand.u32 2147483647, %v239
    %vm250 = vcmp.eq.f32.partialorder %v249, 8.507059e+37
    %v251 = vand.u32 %v239, 2147483648
    %v252 = vor.u32 1.1754944e-38, %v251
    %v253 = vsel %vm250, %v252, %v248
    %v254 = vmul.f32 1.0, %v253
    %v255 = vperm.slane %v80, 1
    %v256 = vand.u32 %v47, 4294901760
    %257 = vmatpush.msra.mxu0 %v256
    %v258 = vand.u32 %v46, 4294901760
    %259 = vmatpush.msra.mxu0 %v258
    %v260 = vand.u32 %v45, 4294901760
    %261 = vmatpush.msra.mxu0 %v260
    %v262 = vand.u32 %v44, 4294901760
    %263 = vmatpush.msra.mxu0 %v262
    %v264 = vand.u32 %v43, 4294901760
    %265 = vmatpush.msra.mxu0 %v264
    %v266 = vand.u32 %v42, 4294901760
    %267 = vmatpush.msra.mxu0 %v266
    %v268 = vand.u32 %v41, 4294901760
    %269 = vmatpush.msra.mxu0 %v268
    %v270 = vand.u32 %v40, 4294901760
    %271 = vmatpush.msra.mxu0 %v270
    %v272 = vand.u32 %v39, 4294901760
    %273 = vmatpush.msra.mxu0 %v272
    %v274 = vand.u32 %v38, 4294901760
    %275 = vmatpush.msra.mxu0 %v274
    %v276 = vand.u32 %v37, 4294901760
    %277 = vmatpush.msra.mxu0 %v276
    %v278 = vand.u32 %v36, 4294901760
    %279 = vmatpush.msra.mxu0 %v278
    %v280 = vand.u32 %v35, 4294901760
    %281 = vmatpush.msra.mxu0 %v280
    %v282 = vand.u32 %v34, 4294901760
    %283 = vmatpush.msra.mxu0 %v282
    %v284 = vand.u32 %v33, 4294901760
    %285 = vmatpush.msra.mxu0 %v284
    %v286 = vand.u32 %v32, 4294901760
    %287 = vmatpush.msra.mxu0 %v286
    %v288 = vand.u32 %v254, 4294901760
    %v289 = vsub.f32 %v254, %v288
    %v290 = vand.u32 %v289, 4294901760
    %v291 = vsub.f32 %v289, %v290
    %v292 = vand.u32 %v291, 4294901760
    %293 = vmatmul.f32.gmra.mxu0 %v292
    %v294 = vpop.f32.mrf.mxu0
    %v295 = vadd.f32 %v255, %v294
    %296 = vdwg.mxu0
    %v297 = vand.u32 %v47, 4294901760
    %v298 = vsub.f32 %v47, %v297
    %v299 = vand.u32 %v298, 4294901760
    %v300 = vsub.f32 %v298, %v299
    %v301 = vand.u32 %v300, 4294901760
    %302 = vmatpush.msra.mxu0 %v301
    %v303 = vand.u32 %v46, 4294901760
    %v304 = vsub.f32 %v46, %v303
    %v305 = vand.u32 %v304, 4294901760
    %v306 = vsub.f32 %v304, %v305
    %v307 = vand.u32 %v306, 4294901760
    %308 = vmatpush.msra.mxu0 %v307
    %v309 = vand.u32 %v45, 4294901760
    %v310 = vsub.f32 %v45, %v309
    %v311 = vand.u32 %v310, 4294901760
    %v312 = vsub.f32 %v310, %v311
    %v313 = vand.u32 %v312, 4294901760
    %314 = vmatpush.msra.mxu0 %v313
    %v315 = vand.u32 %v44, 4294901760
    %v316 = vsub.f32 %v44, %v315
    %v317 = vand.u32 %v316, 4294901760
    %v318 = vsub.f32 %v316, %v317
    %v319 = vand.u32 %v318, 4294901760
    %320 = vmatpush.msra.mxu0 %v319
    %v321 = vand.u32 %v43, 4294901760
    %v322 = vsub.f32 %v43, %v321
    %v323 = vand.u32 %v322, 4294901760
    %v324 = vsub.f32 %v322, %v323
    %v325 = vand.u32 %v324, 4294901760
    %326 = vmatpush.msra.mxu0 %v325
    %v327 = vand.u32 %v42, 4294901760
    %v328 = vsub.f32 %v42, %v327
    %v329 = vand.u32 %v328, 4294901760
    %v330 = vsub.f32 %v328, %v329
    %v331 = vand.u32 %v330, 4294901760
    %332 = vmatpush.msra.mxu0 %v331
    %v333 = vand.u32 %v41, 4294901760
    %v334 = vsub.f32 %v41, %v333
    %v335 = vand.u32 %v334, 4294901760
    %v336 = vsub.f32 %v334, %v335
    %v337 = vand.u32 %v336, 4294901760
    %338 = vmatpush.msra.mxu0 %v337
    %v339 = vand.u32 %v40, 4294901760
    %v340 = vsub.f32 %v40, %v339
    %v341 = vand.u32 %v340, 4294901760
    %v342 = vsub.f32 %v340, %v341
    %v343 = vand.u32 %v342, 4294901760
    %344 = vmatpush.msra.mxu0 %v343
    %v345 = vand.u32 %v39, 4294901760
    %v346 = vsub.f32 %v39, %v345
    %v347 = vand.u32 %v346, 4294901760
    %v348 = vsub.f32 %v346, %v347
    %v349 = vand.u32 %v348, 4294901760
    %350 = vmatpush.msra.mxu0 %v349
    %v351 = vand.u32 %v38, 4294901760
    %v352 = vsub.f32 %v38, %v351
    %v353 = vand.u32 %v352, 4294901760
    %v354 = vsub.f32 %v352, %v353
    %v355 = vand.u32 %v354, 4294901760
    %356 = vmatpush.msra.mxu0 %v355
    %v357 = vand.u32 %v37, 4294901760
    %v358 = vsub.f32 %v37, %v357
    %v359 = vand.u32 %v358, 4294901760
    %v360 = vsub.f32 %v358, %v359
    %v361 = vand.u32 %v360, 4294901760
    %362 = vmatpush.msra.mxu0 %v361
    %v363 = vand.u32 %v36, 4294901760
    %v364 = vsub.f32 %v36, %v363
    %v365 = vand.u32 %v364, 4294901760
    %v366 = vsub.f32 %v364, %v365
    %v367 = vand.u32 %v366, 4294901760
    %368 = vmatpush.msra.mxu0 %v367
    %v369 = vand.u32 %v35, 4294901760
    %v370 = vsub.f32 %v35, %v369
    %v371 = vand.u32 %v370, 4294901760
    %v372 = vsub.f32 %v370, %v371
    %v373 = vand.u32 %v372, 4294901760
    %374 = vmatpush.msra.mxu0 %v373
    %v375 = vand.u32 %v34, 4294901760
    %v376 = vsub.f32 %v34, %v375
    %v377 = vand.u32 %v376, 4294901760
    %v378 = vsub.f32 %v376, %v377
    %v379 = vand.u32 %v378, 4294901760
    %380 = vmatpush.msra.mxu0 %v379
    %v381 = vand.u32 %v33, 4294901760
    %v382 = vsub.f32 %v33, %v381
    %v383 = vand.u32 %v382, 4294901760
    %v384 = vsub.f32 %v382, %v383
    %v385 = vand.u32 %v384, 4294901760
    %386 = vmatpush.msra.mxu0 %v385
    %v387 = vand.u32 %v32, 4294901760
    %v388 = vsub.f32 %v32, %v387
    %v389 = vand.u32 %v388, 4294901760
    %v390 = vsub.f32 %v388, %v389
    %v391 = vand.u32 %v390, 4294901760
    %392 = vmatpush.msra.mxu0 %v391
    %v393 = vand.u32 %v254, 4294901760
    %394 = vmatmul.f32.gmra.mxu0 %v393
    %v395 = vpop.f32.mrf.mxu0
    %v396 = vadd.f32 %v295, %v395
    %397 = vdwg.mxu0
    %v398 = vand.u32 %v47, 4294901760
    %v399 = vsub.f32 %v47, %v398
    %400 = vmatpush.msra.mxu0 %v399
    %v401 = vand.u32 %v46, 4294901760
    %v402 = vsub.f32 %v46, %v401
    %403 = vmatpush.msra.mxu0 %v402
    %v404 = vand.u32 %v45, 4294901760
    %v405 = vsub.f32 %v45, %v404
    %406 = vmatpush.msra.mxu0 %v405
    %v407 = vand.u32 %v44, 4294901760
    %v408 = vsub.f32 %v44, %v407
    %409 = vmatpush.msra.mxu0 %v408
    %v410 = vand.u32 %v43, 4294901760
    %v411 = vsub.f32 %v43, %v410
    %412 = vmatpush.msra.mxu0 %v411
    %v413 = vand.u32 %v42, 4294901760
    %v414 = vsub.f32 %v42, %v413
    %415 = vmatpush.msra.mxu0 %v414
    %v416 = vand.u32 %v41, 4294901760
    %v417 = vsub.f32 %v41, %v416
    %418 = vmatpush.msra.mxu0 %v417
    %v419 = vand.u32 %v40, 4294901760
    %v420 = vsub.f32 %v40, %v419
    %421 = vmatpush.msra.mxu0 %v420
    %v422 = vand.u32 %v39, 4294901760
    %v423 = vsub.f32 %v39, %v422
    %424 = vmatpush.msra.mxu0 %v423
    %v425 = vand.u32 %v38, 4294901760
    %v426 = vsub.f32 %v38, %v425
    %427 = vmatpush.msra.mxu0 %v426
    %v428 = vand.u32 %v37, 4294901760
    %v429 = vsub.f32 %v37, %v428
    %430 = vmatpush.msra.mxu0 %v429
    %v431 = vand.u32 %v36, 4294901760
    %v432 = vsub.f32 %v36, %v431
    %433 = vmatpush.msra.mxu0 %v432
    %v434 = vand.u32 %v35, 4294901760
    %v435 = vsub.f32 %v35, %v434
    %436 = vmatpush.msra.mxu0 %v435
    %v437 = vand.u32 %v34, 4294901760
    %v438 = vsub.f32 %v34, %v437
    %439 = vmatpush.msra.mxu0 %v438
    %v440 = vand.u32 %v33, 4294901760
    %v441 = vsub.f32 %v33, %v440
    %442 = vmatpush.msra.mxu0 %v441
    %v443 = vand.u32 %v32, 4294901760
    %v444 = vsub.f32 %v32, %v443
    %445 = vmatpush.msra.mxu0 %v444
    %v446 = vand.u32 %v254, 4294901760
    %v447 = vsub.f32 %v254, %v446
    %448 = vmatmul.f32.gmra.mxu0 %v447
    %v449 = vpop.f32.mrf.mxu0
    %v450 = vadd.f32 %v396, %v449
    %451 = vdwg.mxu0
    %v452 = vand.u32 %v47, 4294901760
    %453 = vmatpush.msra.mxu0 %v452
    %v454 = vand.u32 %v46, 4294901760
    %455 = vmatpush.msra.mxu0 %v454
    %v456 = vand.u32 %v45, 4294901760
    %457 = vmatpush.msra.mxu0 %v456
    %v458 = vand.u32 %v44, 4294901760
    %459 = vmatpush.msra.mxu0 %v458
    %v460 = vand.u32 %v43, 4294901760
    %461 = vmatpush.msra.mxu0 %v460
    %v462 = vand.u32 %v42, 4294901760
    %463 = vmatpush.msra.mxu0 %v462
    %v464 = vand.u32 %v41, 4294901760
    %465 = vmatpush.msra.mxu0 %v464
    %v466 = vand.u32 %v40, 4294901760
    %467 = vmatpush.msra.mxu0 %v466
    %v468 = vand.u32 %v39, 4294901760
    %469 = vmatpush.msra.mxu0 %v468
    %v470 = vand.u32 %v38, 4294901760
    %471 = vmatpush.msra.mxu0 %v470
    %v472 = vand.u32 %v37, 4294901760
    %473 = vmatpush.msra.mxu0 %v472
    %v474 = vand.u32 %v36, 4294901760
    %475 = vmatpush.msra.mxu0 %v474
    %v476 = vand.u32 %v35, 4294901760
    %477 = vmatpush.msra.mxu0 %v476
    %v478 = vand.u32 %v34, 4294901760
    %479 = vmatpush.msra.mxu0 %v478
    %v480 = vand.u32 %v33, 4294901760
    %481 = vmatpush.msra.mxu0 %v480
    %v482 = vand.u32 %v32, 4294901760
    %483 = vmatpush.msra.mxu0 %v482
    %v484 = vand.u32 %v254, 4294901760
    %v485 = vsub.f32 %v254, %v484
    %v486 = vand.u32 %v485, 4294901760
    %487 = vmatmul.f32.gmra.mxu0 %v486
    %v488 = vpop.f32.mrf.mxu0
    %v489 = vadd.f32 %v450, %v488
    %490 = vdwg.mxu0
    %v491 = vand.u32 %v47, 4294901760
    %v492 = vsub.f32 %v47, %v491
    %v493 = vand.u32 %v492, 4294901760
    %494 = vmatpush.msra.mxu0 %v493
    %v495 = vand.u32 %v46, 4294901760
    %v496 = vsub.f32 %v46, %v495
    %v497 = vand.u32 %v496, 4294901760
    %498 = vmatpush.msra.mxu0 %v497
    %v499 = vand.u32 %v45, 4294901760
    %v500 = vsub.f32 %v45, %v499
    %v501 = vand.u32 %v500, 4294901760
    %502 = vmatpush.msra.mxu0 %v501
    %v503 = vand.u32 %v44, 4294901760
    %v504 = vsub.f32 %v44, %v503
    %v505 = vand.u32 %v504, 4294901760
    %506 = vmatpush.msra.mxu0 %v505
    %v507 = vand.u32 %v43, 4294901760
    %v508 = vsub.f32 %v43, %v507
    %v509 = vand.u32 %v508, 4294901760
    %510 = vmatpush.msra.mxu0 %v509
    %v511 = vand.u32 %v42, 4294901760
    %v512 = vsub.f32 %v42, %v511
    %v513 = vand.u32 %v512, 4294901760
    %514 = vmatpush.msra.mxu0 %v513
    %v515 = vand.u32 %v41, 4294901760
    %v516 = vsub.f32 %v41, %v515
    %v517 = vand.u32 %v516, 4294901760
    %518 = vmatpush.msra.mxu0 %v517
    %v519 = vand.u32 %v40, 4294901760
    %v520 = vsub.f32 %v40, %v519
    %v521 = vand.u32 %v520, 4294901760
    %522 = vmatpush.msra.mxu0 %v521
    %v523 = vand.u32 %v39, 4294901760
    %v524 = vsub.f32 %v39, %v523
    %v525 = vand.u32 %v524, 4294901760
    %526 = vmatpush.msra.mxu0 %v525
    %v527 = vand.u32 %v38, 4294901760
    %v528 = vsub.f32 %v38, %v527
    %v529 = vand.u32 %v528, 4294901760
    %530 = vmatpush.msra.mxu0 %v529
    %v531 = vand.u32 %v37, 4294901760
    %v532 = vsub.f32 %v37, %v531
    %v533 = vand.u32 %v532, 4294901760
    %534 = vmatpush.msra.mxu0 %v533
    %v535 = vand.u32 %v36, 4294901760
    %v536 = vsub.f32 %v36, %v535
    %v537 = vand.u32 %v536, 4294901760
    %538 = vmatpush.msra.mxu0 %v537
    %v539 = vand.u32 %v35, 4294901760
    %v540 = vsub.f32 %v35, %v539
    %v541 = vand.u32 %v540, 4294901760
    %542 = vmatpush.msra.mxu0 %v541
    %v543 = vand.u32 %v34, 4294901760
    %v544 = vsub.f32 %v34, %v543
    %v545 = vand.u32 %v544, 4294901760
    %546 = vmatpush.msra.mxu0 %v545
    %v547 = vand.u32 %v33, 4294901760
    %v548 = vsub.f32 %v33, %v547
    %v549 = vand.u32 %v548, 4294901760
    %550 = vmatpush.msra.mxu0 %v549
    %v551 = vand.u32 %v32, 4294901760
    %v552 = vsub.f32 %v32, %v551
    %v553 = vand.u32 %v552, 4294901760
    %554 = vmatpush.msra.mxu0 %v553
    %v555 = vand.u32 %v254, 4294901760
    %556 = vmatmul.f32.gmra.mxu0 %v555
    %v557 = vpop.f32.mrf.mxu0
    %v558 = vadd.f32 %v489, %v557
    %559 = vdwg.mxu0
    %v560 = vand.u32 %v47, 4294901760
    %561 = vmatpush.msra.mxu0 %v560
    %v562 = vand.u32 %v46, 4294901760
    %563 = vmatpush.msra.mxu0 %v562
    %v564 = vand.u32 %v45, 4294901760
    %565 = vmatpush.msra.mxu0 %v564
    %v566 = vand.u32 %v44, 4294901760
    %567 = vmatpush.msra.mxu0 %v566
    %v568 = vand.u32 %v43, 4294901760
    %569 = vmatpush.msra.mxu0 %v568
    %v570 = vand.u32 %v42, 4294901760
    %571 = vmatpush.msra.mxu0 %v570
    %v572 = vand.u32 %v41, 4294901760
    %573 = vmatpush.msra.mxu0 %v572
    %v574 = vand.u32 %v40, 4294901760
    %575 = vmatpush.msra.mxu0 %v574
    %v576 = vand.u32 %v39, 4294901760
    %577 = vmatpush.msra.mxu0 %v576
    %v578 = vand.u32 %v38, 4294901760
    %579 = vmatpush.msra.mxu0 %v578
    %v580 = vand.u32 %v37, 4294901760
    %581 = vmatpush.msra.mxu0 %v580
    %v582 = vand.u32 %v36, 4294901760
    %583 = vmatpush.msra.mxu0 %v582
    %v584 = vand.u32 %v35, 4294901760
    %585 = vmatpush.msra.mxu0 %v584
    %v586 = vand.u32 %v34, 4294901760
    %587 = vmatpush.msra.mxu0 %v586
    %v588 = vand.u32 %v33, 4294901760
    %589 = vmatpush.msra.mxu0 %v588
    %v590 = vand.u32 %v32, 4294901760
    %591 = vmatpush.msra.mxu0 %v590
    %v592 = vand.u32 %v254, 4294901760
    %593 = vmatmul.f32.gmra.mxu0 %v592
    %v594 = vpop.f32.mrf.mxu0
    %v595 = vadd.f32 %v558, %v594
    %596 = vdwg.mxu0
    %v597 = vxor.u32 %v595, 2147483648
    %v598 = vmul.f32 %v597, 1.442695
    %v599 = vpow.pop %v598
    %v600 = vadd.f32 %v599, 1.0
    %v601 = vrcp.pop %v600
    %v602 = vmul.f32 %v600, %v601
    %v603 = vsub.f32 1.0, %v602
    %v604 = vmul.f32 %v601, %v603
    %v605 = vadd.f32 %v601, %v604
    %vm606 = vweird.f32 %v600
    %vm607 = vweird.f32 %v601
    %vm608 = vmor %vm606, %vm607
    %v609 = vsel %vm608, %v601, %v605
    %v610 = vand.u32 2147483647, %v600
    %vm611 = vcmp.eq.f32.partialorder %v610, 8.507059e+37
    %v612 = vand.u32 %v600, 2147483648
    %v613 = vor.u32 1.1754944e-38, %v612
    %v614 = vsel %vm611, %v613, %v609
    %v615 = vmul.f32 1.0, %v614
    %v616 = vperm.slane %v80, 2
    %v617 = vand.u32 %v63, 4294901760
    %618 = vmatpush.msra.mxu0 %v617
    %v619 = vand.u32 %v62, 4294901760
    %620 = vmatpush.msra.mxu0 %v619
    %v621 = vand.u32 %v61, 4294901760
    %622 = vmatpush.msra.mxu0 %v621
    %v623 = vand.u32 %v60, 4294901760
    %624 = vmatpush.msra.mxu0 %v623
    %v625 = vand.u32 %v59, 4294901760
    %626 = vmatpush.msra.mxu0 %v625
    %v627 = vand.u32 %v58, 4294901760
    %628 = vmatpush.msra.mxu0 %v627
    %v629 = vand.u32 %v57, 4294901760
    %630 = vmatpush.msra.mxu0 %v629
    %v631 = vand.u32 %v56, 4294901760
    %632 = vmatpush.msra.mxu0 %v631
    %v633 = vand.u32 %v55, 4294901760
    %634 = vmatpush.msra.mxu0 %v633
    %v635 = vand.u32 %v54, 4294901760
    %636 = vmatpush.msra.mxu0 %v635
    %v637 = vand.u32 %v53, 4294901760
    %638 = vmatpush.msra.mxu0 %v637
    %v639 = vand.u32 %v52, 4294901760
    %640 = vmatpush.msra.mxu0 %v639
    %v641 = vand.u32 %v51, 4294901760
    %642 = vmatpush.msra.mxu0 %v641
    %v643 = vand.u32 %v50, 4294901760
    %644 = vmatpush.msra.mxu0 %v643
    %v645 = vand.u32 %v49, 4294901760
    %646 = vmatpush.msra.mxu0 %v645
    %v647 = vand.u32 %v48, 4294901760
    %648 = vmatpush.msra.mxu0 %v647
    %v649 = vand.u32 %v615, 4294901760
    %v650 = vsub.f32 %v615, %v649
    %v651 = vand.u32 %v650, 4294901760
    %v652 = vsub.f32 %v650, %v651
    %v653 = vand.u32 %v652, 4294901760
    %654 = vmatmul.f32.gmra.mxu0 %v653
    %v655 = vpop.f32.mrf.mxu0
    %v656 = vadd.f32 %v616, %v655
    %657 = vdwg.mxu0
    %v658 = vand.u32 %v63, 4294901760
    %v659 = vsub.f32 %v63, %v658
    %v660 = vand.u32 %v659, 4294901760
    %v661 = vsub.f32 %v659, %v660
    %v662 = vand.u32 %v661, 4294901760
    %663 = vmatpush.msra.mxu0 %v662
    %v664 = vand.u32 %v62, 4294901760
    %v665 = vsub.f32 %v62, %v664
    %v666 = vand.u32 %v665, 4294901760
    %v667 = vsub.f32 %v665, %v666
    %v668 = vand.u32 %v667, 4294901760
    %669 = vmatpush.msra.mxu0 %v668
    %v670 = vand.u32 %v61, 4294901760
    %v671 = vsub.f32 %v61, %v670
    %v672 = vand.u32 %v671, 4294901760
    %v673 = vsub.f32 %v671, %v672
    %v674 = vand.u32 %v673, 4294901760
    %675 = vmatpush.msra.mxu0 %v674
    %v676 = vand.u32 %v60, 4294901760
    %v677 = vsub.f32 %v60, %v676
    %v678 = vand.u32 %v677, 4294901760
    %v679 = vsub.f32 %v677, %v678
    %v680 = vand.u32 %v679, 4294901760
    %681 = vmatpush.msra.mxu0 %v680
    %v682 = vand.u32 %v59, 4294901760
    %v683 = vsub.f32 %v59, %v682
    %v684 = vand.u32 %v683, 4294901760
    %v685 = vsub.f32 %v683, %v684
    %v686 = vand.u32 %v685, 4294901760
    %687 = vmatpush.msra.mxu0 %v686
    %v688 = vand.u32 %v58, 4294901760
    %v689 = vsub.f32 %v58, %v688
    %v690 = vand.u32 %v689, 4294901760
    %v691 = vsub.f32 %v689, %v690
    %v692 = vand.u32 %v691, 4294901760
    %693 = vmatpush.msra.mxu0 %v692
    %v694 = vand.u32 %v57, 4294901760
    %v695 = vsub.f32 %v57, %v694
    %v696 = vand.u32 %v695, 4294901760
    %v697 = vsub.f32 %v695, %v696
    %v698 = vand.u32 %v697, 4294901760
    %699 = vmatpush.msra.mxu0 %v698
    %v700 = vand.u32 %v56, 4294901760
    %v701 = vsub.f32 %v56, %v700
    %v702 = vand.u32 %v701, 4294901760
    %v703 = vsub.f32 %v701, %v702
    %v704 = vand.u32 %v703, 4294901760
    %705 = vmatpush.msra.mxu0 %v704
    %v706 = vand.u32 %v55, 4294901760
    %v707 = vsub.f32 %v55, %v706
    %v708 = vand.u32 %v707, 4294901760
    %v709 = vsub.f32 %v707, %v708
    %v710 = vand.u32 %v709, 4294901760
    %711 = vmatpush.msra.mxu0 %v710
    %v712 = vand.u32 %v54, 4294901760
    %v713 = vsub.f32 %v54, %v712
    %v714 = vand.u32 %v713, 4294901760
    %v715 = vsub.f32 %v713, %v714
    %v716 = vand.u32 %v715, 4294901760
    %717 = vmatpush.msra.mxu0 %v716
    %v718 = vand.u32 %v53, 4294901760
    %v719 = vsub.f32 %v53, %v718
    %v720 = vand.u32 %v719, 4294901760
    %v721 = vsub.f32 %v719, %v720
    %v722 = vand.u32 %v721, 4294901760
    %723 = vmatpush.msra.mxu0 %v722
    %v724 = vand.u32 %v52, 4294901760
    %v725 = vsub.f32 %v52, %v724
    %v726 = vand.u32 %v725, 4294901760
    %v727 = vsub.f32 %v725, %v726
    %v728 = vand.u32 %v727, 4294901760
    %729 = vmatpush.msra.mxu0 %v728
    %v730 = vand.u32 %v51, 4294901760
    %v731 = vsub.f32 %v51, %v730
    %v732 = vand.u32 %v731, 4294901760
    %v733 = vsub.f32 %v731, %v732
    %v734 = vand.u32 %v733, 4294901760
    %735 = vmatpush.msra.mxu0 %v734
    %v736 = vand.u32 %v50, 4294901760
    %v737 = vsub.f32 %v50, %v736
    %v738 = vand.u32 %v737, 4294901760
    %v739 = vsub.f32 %v737, %v738
    %v740 = vand.u32 %v739, 4294901760
    %741 = vmatpush.msra.mxu0 %v740
    %v742 = vand.u32 %v49, 4294901760
    %v743 = vsub.f32 %v49, %v742
    %v744 = vand.u32 %v743, 4294901760
    %v745 = vsub.f32 %v743, %v744
    %v746 = vand.u32 %v745, 4294901760
    %747 = vmatpush.msra.mxu0 %v746
    %v748 = vand.u32 %v48, 4294901760
    %v749 = vsub.f32 %v48, %v748
    %v750 = vand.u32 %v749, 4294901760
    %v751 = vsub.f32 %v749, %v750
    %v752 = vand.u32 %v751, 4294901760
    %753 = vmatpush.msra.mxu0 %v752
    %v754 = vand.u32 %v615, 4294901760
    %755 = vmatmul.f32.gmra.mxu0 %v754
    %v756 = vpop.f32.mrf.mxu0
    %v757 = vadd.f32 %v656, %v756
    %758 = vdwg.mxu0
    %v759 = vand.u32 %v63, 4294901760
    %v760 = vsub.f32 %v63, %v759
    %761 = vmatpush.msra.mxu0 %v760
    %v762 = vand.u32 %v62, 4294901760
    %v763 = vsub.f32 %v62, %v762
    %764 = vmatpush.msra.mxu0 %v763
    %v765 = vand.u32 %v61, 4294901760
    %v766 = vsub.f32 %v61, %v765
    %767 = vmatpush.msra.mxu0 %v766
    %v768 = vand.u32 %v60, 4294901760
    %v769 = vsub.f32 %v60, %v768
    %770 = vmatpush.msra.mxu0 %v769
    %v771 = vand.u32 %v59, 4294901760
    %v772 = vsub.f32 %v59, %v771
    %773 = vmatpush.msra.mxu0 %v772
    %v774 = vand.u32 %v58, 4294901760
    %v775 = vsub.f32 %v58, %v774
    %776 = vmatpush.msra.mxu0 %v775
    %v777 = vand.u32 %v57, 4294901760
    %v778 = vsub.f32 %v57, %v777
    %779 = vmatpush.msra.mxu0 %v778
    %v780 = vand.u32 %v56, 4294901760
    %v781 = vsub.f32 %v56, %v780
    %782 = vmatpush.msra.mxu0 %v781
    %v783 = vand.u32 %v55, 4294901760
    %v784 = vsub.f32 %v55, %v783
    %785 = vmatpush.msra.mxu0 %v784
    %v786 = vand.u32 %v54, 4294901760
    %v787 = vsub.f32 %v54, %v786
    %788 = vmatpush.msra.mxu0 %v787
    %v789 = vand.u32 %v53, 4294901760
    %v790 = vsub.f32 %v53, %v789
    %791 = vmatpush.msra.mxu0 %v790
    %v792 = vand.u32 %v52, 4294901760
    %v793 = vsub.f32 %v52, %v792
    %794 = vmatpush.msra.mxu0 %v793
    %v795 = vand.u32 %v51, 4294901760
    %v796 = vsub.f32 %v51, %v795
    %797 = vmatpush.msra.mxu0 %v796
    %v798 = vand.u32 %v50, 4294901760
    %v799 = vsub.f32 %v50, %v798
    %800 = vmatpush.msra.mxu0 %v799
    %v801 = vand.u32 %v49, 4294901760
    %v802 = vsub.f32 %v49, %v801
    %803 = vmatpush.msra.mxu0 %v802
    %v804 = vand.u32 %v48, 4294901760
    %v805 = vsub.f32 %v48, %v804
    %806 = vmatpush.msra.mxu0 %v805
    %v807 = vand.u32 %v615, 4294901760
    %v808 = vsub.f32 %v615, %v807
    %809 = vmatmul.f32.gmra.mxu0 %v808
    %v810 = vpop.f32.mrf.mxu0
    %v811 = vadd.f32 %v757, %v810
    %812 = vdwg.mxu0
    %v813 = vand.u32 %v63, 4294901760
    %814 = vmatpush.msra.mxu0 %v813
    %v815 = vand.u32 %v62, 4294901760
    %816 = vmatpush.msra.mxu0 %v815
    %v817 = vand.u32 %v61, 4294901760
    %818 = vmatpush.msra.mxu0 %v817
    %v819 = vand.u32 %v60, 4294901760
    %820 = vmatpush.msra.mxu0 %v819
    %v821 = vand.u32 %v59, 4294901760
    %822 = vmatpush.msra.mxu0 %v821
    %v823 = vand.u32 %v58, 4294901760
    %824 = vmatpush.msra.mxu0 %v823
    %v825 = vand.u32 %v57, 4294901760
    %826 = vmatpush.msra.mxu0 %v825
    %v827 = vand.u32 %v56, 4294901760
    %828 = vmatpush.msra.mxu0 %v827
    %v829 = vand.u32 %v55, 4294901760
    %830 = vmatpush.msra.mxu0 %v829
    %v831 = vand.u32 %v54, 4294901760
    %832 = vmatpush.msra.mxu0 %v831
    %v833 = vand.u32 %v53, 4294901760
    %834 = vmatpush.msra.mxu0 %v833
    %v835 = vand.u32 %v52, 4294901760
    %836 = vmatpush.msra.mxu0 %v835
    %v837 = vand.u32 %v51, 4294901760
    %838 = vmatpush.msra.mxu0 %v837
    %v839 = vand.u32 %v50, 4294901760
    %840 = vmatpush.msra.mxu0 %v839
    %v841 = vand.u32 %v49, 4294901760
    %842 = vmatpush.msra.mxu0 %v841
    %v843 = vand.u32 %v48, 4294901760
    %844 = vmatpush.msra.mxu0 %v843
    %v845 = vand.u32 %v615, 4294901760
    %v846 = vsub.f32 %v615, %v845
    %v847 = vand.u32 %v846, 4294901760
    %848 = vmatmul.f32.gmra.mxu0 %v847
    %v849 = vpop.f32.mrf.mxu0
    %v850 = vadd.f32 %v811, %v849
    %851 = vdwg.mxu0
    %v852 = vand.u32 %v63, 4294901760
    %v853 = vsub.f32 %v63, %v852
    %v854 = vand.u32 %v853, 4294901760
    %855 = vmatpush.msra.mxu0 %v854
    %v856 = vand.u32 %v62, 4294901760
    %v857 = vsub.f32 %v62, %v856
    %v858 = vand.u32 %v857, 4294901760
    %859 = vmatpush.msra.mxu0 %v858
    %v860 = vand.u32 %v61, 4294901760
    %v861 = vsub.f32 %v61, %v860
    %v862 = vand.u32 %v861, 4294901760
    %863 = vmatpush.msra.mxu0 %v862
    %v864 = vand.u32 %v60, 4294901760
    %v865 = vsub.f32 %v60, %v864
    %v866 = vand.u32 %v865, 4294901760
    %867 = vmatpush.msra.mxu0 %v866
    %v868 = vand.u32 %v59, 4294901760
    %v869 = vsub.f32 %v59, %v868
    %v870 = vand.u32 %v869, 4294901760
    %871 = vmatpush.msra.mxu0 %v870
    %v872 = vand.u32 %v58, 4294901760
    %v873 = vsub.f32 %v58, %v872
    %v874 = vand.u32 %v873, 4294901760
    %875 = vmatpush.msra.mxu0 %v874
    %v876 = vand.u32 %v57, 4294901760
    %v877 = vsub.f32 %v57, %v876
    %v878 = vand.u32 %v877, 4294901760
    %879 = vmatpush.msra.mxu0 %v878
    %v880 = vand.u32 %v56, 4294901760
    %v881 = vsub.f32 %v56, %v880
    %v882 = vand.u32 %v881, 4294901760
    %883 = vmatpush.msra.mxu0 %v882
    %v884 = vand.u32 %v55, 4294901760
    %v885 = vsub.f32 %v55, %v884
    %v886 = vand.u32 %v885, 4294901760
    %887 = vmatpush.msra.mxu0 %v886
    %v888 = vand.u32 %v54, 4294901760
    %v889 = vsub.f32 %v54, %v888
    %v890 = vand.u32 %v889, 4294901760
    %891 = vmatpush.msra.mxu0 %v890
    %v892 = vand.u32 %v53, 4294901760
    %v893 = vsub.f32 %v53, %v892
    %v894 = vand.u32 %v893, 4294901760
    %895 = vmatpush.msra.mxu0 %v894
    %v896 = vand.u32 %v52, 4294901760
    %v897 = vsub.f32 %v52, %v896
    %v898 = vand.u32 %v897, 4294901760
    %899 = vmatpush.msra.mxu0 %v898
    %v900 = vand.u32 %v51, 4294901760
    %v901 = vsub.f32 %v51, %v900
    %v902 = vand.u32 %v901, 4294901760
    %903 = vmatpush.msra.mxu0 %v902
    %v904 = vand.u32 %v50, 4294901760
    %v905 = vsub.f32 %v50, %v904
    %v906 = vand.u32 %v905, 4294901760
    %907 = vmatpush.msra.mxu0 %v906
    %v908 = vand.u32 %v49, 4294901760
    %v909 = vsub.f32 %v49, %v908
    %v910 = vand.u32 %v909, 4294901760
    %911 = vmatpush.msra.mxu0 %v910
    %v912 = vand.u32 %v48, 4294901760
    %v913 = vsub.f32 %v48, %v912
    %v914 = vand.u32 %v913, 4294901760
    %915 = vmatpush.msra.mxu0 %v914
    %v916 = vand.u32 %v615, 4294901760
    %917 = vmatmul.f32.gmra.mxu0 %v916
    %v918 = vpop.f32.mrf.mxu0
    %v919 = vadd.f32 %v850, %v918
    %920 = vdwg.mxu0
    %v921 = vand.u32 %v63, 4294901760
    %922 = vmatpush.msra.mxu0 %v921
    %v923 = vand.u32 %v62, 4294901760
    %924 = vmatpush.msra.mxu0 %v923
    %v925 = vand.u32 %v61, 4294901760
    %926 = vmatpush.msra.mxu0 %v925
    %v927 = vand.u32 %v60, 4294901760
    %928 = vmatpush.msra.mxu0 %v927
    %v929 = vand.u32 %v59, 4294901760
    %930 = vmatpush.msra.mxu0 %v929
    %v931 = vand.u32 %v58, 4294901760
    %932 = vmatpush.msra.mxu0 %v931
    %v933 = vand.u32 %v57, 4294901760
    %934 = vmatpush.msra.mxu0 %v933
    %v935 = vand.u32 %v56, 4294901760
    %936 = vmatpush.msra.mxu0 %v935
    %v937 = vand.u32 %v55, 4294901760
    %938 = vmatpush.msra.mxu0 %v937
    %v939 = vand.u32 %v54, 4294901760
    %940 = vmatpush.msra.mxu0 %v939
    %v941 = vand.u32 %v53, 4294901760
    %942 = vmatpush.msra.mxu0 %v941
    %v943 = vand.u32 %v52, 4294901760
    %944 = vmatpush.msra.mxu0 %v943
    %v945 = vand.u32 %v51, 4294901760
    %946 = vmatpush.msra.mxu0 %v945
    %v947 = vand.u32 %v50, 4294901760
    %948 = vmatpush.msra.mxu0 %v947
    %v949 = vand.u32 %v49, 4294901760
    %950 = vmatpush.msra.mxu0 %v949
    %v951 = vand.u32 %v48, 4294901760
    %952 = vmatpush.msra.mxu0 %v951
    %v953 = vand.u32 %v615, 4294901760
    %954 = vmatmul.f32.gmra.mxu0 %v953
    %v955 = vpop.f32.mrf.mxu0
    %v956 = vadd.f32 %v919, %v955
    %957 = vdwg.mxu0
    %v958 = vmax.f32 %v956, 0.0
    %v959 = vperm.slane %v80, 3
    %v960 = vand.u32 %v79, 4294901760
    %961 = vmatpush.msra.mxu0 %v960
    %v962 = vand.u32 %v78, 4294901760
    %963 = vmatpush.msra.mxu0 %v962
    %v964 = vand.u32 %v77, 4294901760
    %965 = vmatpush.msra.mxu0 %v964
    %v966 = vand.u32 %v76, 4294901760
    %967 = vmatpush.msra.mxu0 %v966
    %v968 = vand.u32 %v75, 4294901760
    %969 = vmatpush.msra.mxu0 %v968
    %v970 = vand.u32 %v74, 4294901760
    %971 = vmatpush.msra.mxu0 %v970
    %v972 = vand.u32 %v73, 4294901760
    %973 = vmatpush.msra.mxu0 %v972
    %v974 = vand.u32 %v72, 4294901760
    %975 = vmatpush.msra.mxu0 %v974
    %v976 = vand.u32 %v71, 4294901760
    %977 = vmatpush.msra.mxu0 %v976
    %v978 = vand.u32 %v70, 4294901760
    %979 = vmatpush.msra.mxu0 %v978
    %v980 = vand.u32 %v69, 4294901760
    %981 = vmatpush.msra.mxu0 %v980
    %v982 = vand.u32 %v68, 4294901760
    %983 = vmatpush.msra.mxu0 %v982
    %v984 = vand.u32 %v67, 4294901760
    %985 = vmatpush.msra.mxu0 %v984
    %v986 = vand.u32 %v66, 4294901760
    %987 = vmatpush.msra.mxu0 %v986
    %v988 = vand.u32 %v65, 4294901760
    %989 = vmatpush.msra.mxu0 %v988
    %v990 = vand.u32 %v64, 4294901760
    %991 = vmatpush.msra.mxu0 %v990
    %v992 = vand.u32 %v958, 4294901760
    %v993 = vsub.f32 %v958, %v992
    %v994 = vand.u32 %v993, 4294901760
    %v995 = vsub.f32 %v993, %v994
    %v996 = vand.u32 %v995, 4294901760
    %997 = vmatmul.f32.gmra.mxu0 %v996
    %v998 = vpop.f32.mrf.mxu0
    %v999 = vadd.f32 %v959, %v998
    %1000 = vdwg.mxu0
    %v1001 = vand.u32 %v79, 4294901760
    %v1002 = vsub.f32 %v79, %v1001
    %v1003 = vand.u32 %v1002, 4294901760
    %v1004 = vsub.f32 %v1002, %v1003
    %v1005 = vand.u32 %v1004, 4294901760
    %1006 = vmatpush.msra.mxu0 %v1005
    %v1007 = vand.u32 %v78, 4294901760
    %v1008 = vsub.f32 %v78, %v1007
    %v1009 = vand.u32 %v1008, 4294901760
    %v1010 = vsub.f32 %v1008, %v1009
    %v1011 = vand.u32 %v1010, 4294901760
    %1012 = vmatpush.msra.mxu0 %v1011
    %v1013 = vand.u32 %v77, 4294901760
    %v1014 = vsub.f32 %v77, %v1013
    %v1015 = vand.u32 %v1014, 4294901760
    %v1016 = vsub.f32 %v1014, %v1015
    %v1017 = vand.u32 %v1016, 4294901760
    %1018 = vmatpush.msra.mxu0 %v1017
    %v1019 = vand.u32 %v76, 4294901760
    %v1020 = vsub.f32 %v76, %v1019
    %v1021 = vand.u32 %v1020, 4294901760
    %v1022 = vsub.f32 %v1020, %v1021
    %v1023 = vand.u32 %v1022, 4294901760
    %1024 = vmatpush.msra.mxu0 %v1023
    %v1025 = vand.u32 %v75, 4294901760
    %v1026 = vsub.f32 %v75, %v1025
    %v1027 = vand.u32 %v1026, 4294901760
    %v1028 = vsub.f32 %v1026, %v1027
    %v1029 = vand.u32 %v1028, 4294901760
    %1030 = vmatpush.msra.mxu0 %v1029
    %v1031 = vand.u32 %v74, 4294901760
    %v1032 = vsub.f32 %v74, %v1031
    %v1033 = vand.u32 %v1032, 4294901760
    %v1034 = vsub.f32 %v1032, %v1033
    %v1035 = vand.u32 %v1034, 4294901760
    %1036 = vmatpush.msra.mxu0 %v1035
    %v1037 = vand.u32 %v73, 4294901760
    %v1038 = vsub.f32 %v73, %v1037
    %v1039 = vand.u32 %v1038, 4294901760
    %v1040 = vsub.f32 %v1038, %v1039
    %v1041 = vand.u32 %v1040, 4294901760
    %1042 = vmatpush.msra.mxu0 %v1041
    %v1043 = vand.u32 %v72, 4294901760
    %v1044 = vsub.f32 %v72, %v1043
    %v1045 = vand.u32 %v1044, 4294901760
    %v1046 = vsub.f32 %v1044, %v1045
    %v1047 = vand.u32 %v1046, 4294901760
    %1048 = vmatpush.msra.mxu0 %v1047
    %v1049 = vand.u32 %v71, 4294901760
    %v1050 = vsub.f32 %v71, %v1049
    %v1051 = vand.u32 %v1050, 4294901760
    %v1052 = vsub.f32 %v1050, %v1051
    %v1053 = vand.u32 %v1052, 4294901760
    %1054 = vmatpush.msra.mxu0 %v1053
    %v1055 = vand.u32 %v70, 4294901760
    %v1056 = vsub.f32 %v70, %v1055
    %v1057 = vand.u32 %v1056, 4294901760
    %v1058 = vsub.f32 %v1056, %v1057
    %v1059 = vand.u32 %v1058, 4294901760
    %1060 = vmatpush.msra.mxu0 %v1059
    %v1061 = vand.u32 %v69, 4294901760
    %v1062 = vsub.f32 %v69, %v1061
    %v1063 = vand.u32 %v1062, 4294901760
    %v1064 = vsub.f32 %v1062, %v1063
    %v1065 = vand.u32 %v1064, 4294901760
    %1066 = vmatpush.msra.mxu0 %v1065
    %v1067 = vand.u32 %v68, 4294901760
    %v1068 = vsub.f32 %v68, %v1067
    %v1069 = vand.u32 %v1068, 4294901760
    %v1070 = vsub.f32 %v1068, %v1069
    %v1071 = vand.u32 %v1070, 4294901760
    %1072 = vmatpush.msra.mxu0 %v1071
    %v1073 = vand.u32 %v67, 4294901760
    %v1074 = vsub.f32 %v67, %v1073
    %v1075 = vand.u32 %v1074, 4294901760
    %v1076 = vsub.f32 %v1074, %v1075
    %v1077 = vand.u32 %v1076, 4294901760
    %1078 = vmatpush.msra.mxu0 %v1077
    %v1079 = vand.u32 %v66, 4294901760
    %v1080 = vsub.f32 %v66, %v1079
    %v1081 = vand.u32 %v1080, 4294901760
    %v1082 = vsub.f32 %v1080, %v1081
    %v1083 = vand.u32 %v1082, 4294901760
    %1084 = vmatpush.msra.mxu0 %v1083
    %v1085 = vand.u32 %v65, 4294901760
    %v1086 = vsub.f32 %v65, %v1085
    %v1087 = vand.u32 %v1086, 4294901760
    %v1088 = vsub.f32 %v1086, %v1087
    %v1089 = vand.u32 %v1088, 4294901760
    %1090 = vmatpush.msra.mxu0 %v1089
    %v1091 = vand.u32 %v64, 4294901760
    %v1092 = vsub.f32 %v64, %v1091
    %v1093 = vand.u32 %v1092, 4294901760
    %v1094 = vsub.f32 %v1092, %v1093
    %v1095 = vand.u32 %v1094, 4294901760
    %1096 = vmatpush.msra.mxu0 %v1095
    %v1097 = vand.u32 %v958, 4294901760
    %1098 = vmatmul.f32.gmra.mxu0 %v1097
    %v1099 = vpop.f32.mrf.mxu0
    %v1100 = vadd.f32 %v999, %v1099
    %1101 = vdwg.mxu0
    %v1102 = vand.u32 %v79, 4294901760
    %v1103 = vsub.f32 %v79, %v1102
    %1104 = vmatpush.msra.mxu0 %v1103
    %v1105 = vand.u32 %v78, 4294901760
    %v1106 = vsub.f32 %v78, %v1105
    %1107 = vmatpush.msra.mxu0 %v1106
    %v1108 = vand.u32 %v77, 4294901760
    %v1109 = vsub.f32 %v77, %v1108
    %1110 = vmatpush.msra.mxu0 %v1109
    %v1111 = vand.u32 %v76, 4294901760
    %v1112 = vsub.f32 %v76, %v1111
    %1113 = vmatpush.msra.mxu0 %v1112
    %v1114 = vand.u32 %v75, 4294901760
    %v1115 = vsub.f32 %v75, %v1114
    %1116 = vmatpush.msra.mxu0 %v1115
    %v1117 = vand.u32 %v74, 4294901760
    %v1118 = vsub.f32 %v74, %v1117
    %1119 = vmatpush.msra.mxu0 %v1118
    %v1120 = vand.u32 %v73, 4294901760
    %v1121 = vsub.f32 %v73, %v1120
    %1122 = vmatpush.msra.mxu0 %v1121
    %v1123 = vand.u32 %v72, 4294901760
    %v1124 = vsub.f32 %v72, %v1123
    %1125 = vmatpush.msra.mxu0 %v1124
    %v1126 = vand.u32 %v71, 4294901760
    %v1127 = vsub.f32 %v71, %v1126
    %1128 = vmatpush.msra.mxu0 %v1127
    %v1129 = vand.u32 %v70, 4294901760
    %v1130 = vsub.f32 %v70, %v1129
    %1131 = vmatpush.msra.mxu0 %v1130
    %v1132 = vand.u32 %v69, 4294901760
    %v1133 = vsub.f32 %v69, %v1132
    %1134 = vmatpush.msra.mxu0 %v1133
    %v1135 = vand.u32 %v68, 4294901760
    %v1136 = vsub.f32 %v68, %v1135
    %1137 = vmatpush.msra.mxu0 %v1136
    %v1138 = vand.u32 %v67, 4294901760
    %v1139 = vsub.f32 %v67, %v1138
    %1140 = vmatpush.msra.mxu0 %v1139
    %v1141 = vand.u32 %v66, 4294901760
    %v1142 = vsub.f32 %v66, %v1141
    %1143 = vmatpush.msra.mxu0 %v1142
    %v1144 = vand.u32 %v65, 4294901760
    %v1145 = vsub.f32 %v65, %v1144
    %1146 = vmatpush.msra.mxu0 %v1145
    %v1147 = vand.u32 %v64, 4294901760
    %v1148 = vsub.f32 %v64, %v1147
    %1149 = vmatpush.msra.mxu0 %v1148
    %v1150 = vand.u32 %v958, 4294901760
    %v1151 = vsub.f32 %v958, %v1150
    %1152 = vmatmul.f32.gmra.mxu0 %v1151
    %v1153 = vpop.f32.mrf.mxu0
    %v1154 = vadd.f32 %v1100, %v1153
    %1155 = vdwg.mxu0
    %v1156 = vand.u32 %v79, 4294901760
    %1157 = vmatpush.msra.mxu0 %v1156
    %v1158 = vand.u32 %v78, 4294901760
    %1159 = vmatpush.msra.mxu0 %v1158
    %v1160 = vand.u32 %v77, 4294901760
    %1161 = vmatpush.msra.mxu0 %v1160
    %v1162 = vand.u32 %v76, 4294901760
    %1163 = vmatpush.msra.mxu0 %v1162
    %v1164 = vand.u32 %v75, 4294901760
    %1165 = vmatpush.msra.mxu0 %v1164
    %v1166 = vand.u32 %v74, 4294901760
    %1167 = vmatpush.msra.mxu0 %v1166
    %v1168 = vand.u32 %v73, 4294901760
    %1169 = vmatpush.msra.mxu0 %v1168
    %v1170 = vand.u32 %v72, 4294901760
    %1171 = vmatpush.msra.mxu0 %v1170
    %v1172 = vand.u32 %v71, 4294901760
    %1173 = vmatpush.msra.mxu0 %v1172
    %v1174 = vand.u32 %v70, 4294901760
    %1175 = vmatpush.msra.mxu0 %v1174
    %v1176 = vand.u32 %v69, 4294901760
    %1177 = vmatpush.msra.mxu0 %v1176
    %v1178 = vand.u32 %v68, 4294901760
    %1179 = vmatpush.msra.mxu0 %v1178
    %v1180 = vand.u32 %v67, 4294901760
    %1181 = vmatpush.msra.mxu0 %v1180
    %v1182 = vand.u32 %v66, 4294901760
    %1183 = vmatpush.msra.mxu0 %v1182
    %v1184 = vand.u32 %v65, 4294901760
    %1185 = vmatpush.msra.mxu0 %v1184
    %v1186 = vand.u32 %v64, 4294901760
    %1187 = vmatpush.msra.mxu0 %v1186
    %v1188 = vand.u32 %v958, 4294901760
    %v1189 = vsub.f32 %v958, %v1188
    %v1190 = vand.u32 %v1189, 4294901760
    %1191 = vmatmul.f32.gmra.mxu0 %v1190
    %v1192 = vpop.f32.mrf.mxu0
    %v1193 = vadd.f32 %v1154, %v1192
    %1194 = vdwg.mxu0
    %v1195 = vand.u32 %v79, 4294901760
    %v1196 = vsub.f32 %v79, %v1195
    %v1197 = vand.u32 %v1196, 4294901760
    %1198 = vmatpush.msra.mxu0 %v1197
    %v1199 = vand.u32 %v78, 4294901760
    %v1200 = vsub.f32 %v78, %v1199
    %v1201 = vand.u32 %v1200, 4294901760
    %1202 = vmatpush.msra.mxu0 %v1201
    %v1203 = vand.u32 %v77, 4294901760
    %v1204 = vsub.f32 %v77, %v1203
    %v1205 = vand.u32 %v1204, 4294901760
    %1206 = vmatpush.msra.mxu0 %v1205
    %v1207 = vand.u32 %v76, 4294901760
    %v1208 = vsub.f32 %v76, %v1207
    %v1209 = vand.u32 %v1208, 4294901760
    %1210 = vmatpush.msra.mxu0 %v1209
    %v1211 = vand.u32 %v75, 4294901760
    %v1212 = vsub.f32 %v75, %v1211
    %v1213 = vand.u32 %v1212, 4294901760
    %1214 = vmatpush.msra.mxu0 %v1213
    %v1215 = vand.u32 %v74, 4294901760
    %v1216 = vsub.f32 %v74, %v1215
    %v1217 = vand.u32 %v1216, 4294901760
    %1218 = vmatpush.msra.mxu0 %v1217
    %v1219 = vand.u32 %v73, 4294901760
    %v1220 = vsub.f32 %v73, %v1219
    %v1221 = vand.u32 %v1220, 4294901760
    %1222 = vmatpush.msra.mxu0 %v1221
    %v1223 = vand.u32 %v72, 4294901760
    %v1224 = vsub.f32 %v72, %v1223
    %v1225 = vand.u32 %v1224, 4294901760
    %1226 = vmatpush.msra.mxu0 %v1225
    %v1227 = vand.u32 %v71, 4294901760
    %v1228 = vsub.f32 %v71, %v1227
    %v1229 = vand.u32 %v1228, 4294901760
    %1230 = vmatpush.msra.mxu0 %v1229
    %v1231 = vand.u32 %v70, 4294901760
    %v1232 = vsub.f32 %v70, %v1231
    %v1233 = vand.u32 %v1232, 4294901760
    %1234 = vmatpush.msra.mxu0 %v1233
    %v1235 = vand.u32 %v69, 4294901760
    %v1236 = vsub.f32 %v69, %v1235
    %v1237 = vand.u32 %v1236, 4294901760
    %1238 = vmatpush.msra.mxu0 %v1237
    %v1239 = vand.u32 %v68, 4294901760
    %v1240 = vsub.f32 %v68, %v1239
    %v1241 = vand.u32 %v1240, 4294901760
    %1242 = vmatpush.msra.mxu0 %v1241
    %v1243 = vand.u32 %v67, 4294901760
    %v1244 = vsub.f32 %v67, %v1243
    %v1245 = vand.u32 %v1244, 4294901760
    %1246 = vmatpush.msra.mxu0 %v1245
    %v1247 = vand.u32 %v66, 4294901760
    %v1248 = vsub.f32 %v66, %v1247
    %v1249 = vand.u32 %v1248, 4294901760
    %1250 = vmatpush.msra.mxu0 %v1249
    %v1251 = vand.u32 %v65, 4294901760
    %v1252 = vsub.f32 %v65, %v1251
    %v1253 = vand.u32 %v1252, 4294901760
    %1254 = vmatpush.msra.mxu0 %v1253
    %v1255 = vand.u32 %v64, 4294901760
    %v1256 = vsub.f32 %v64, %v1255
    %v1257 = vand.u32 %v1256, 4294901760
    %1258 = vmatpush.msra.mxu0 %v1257
    %v1259 = vand.u32 %v958, 4294901760
    %1260 = vmatmul.f32.gmra.mxu0 %v1259
    %v1261 = vpop.f32.mrf.mxu0
    %v1262 = vadd.f32 %v1193, %v1261
    %1263 = vdwg.mxu0
    %v1264 = vand.u32 %v79, 4294901760
    %1265 = vmatpush.msra.mxu0 %v1264
    %v1266 = vand.u32 %v78, 4294901760
    %1267 = vmatpush.msra.mxu0 %v1266
    %v1268 = vand.u32 %v77, 4294901760
    %1269 = vmatpush.msra.mxu0 %v1268
    %v1270 = vand.u32 %v76, 4294901760
    %1271 = vmatpush.msra.mxu0 %v1270
    %v1272 = vand.u32 %v75, 4294901760
    %1273 = vmatpush.msra.mxu0 %v1272
    %v1274 = vand.u32 %v74, 4294901760
    %1275 = vmatpush.msra.mxu0 %v1274
    %v1276 = vand.u32 %v73, 4294901760
    %1277 = vmatpush.msra.mxu0 %v1276
    %v1278 = vand.u32 %v72, 4294901760
    %1279 = vmatpush.msra.mxu0 %v1278
    %v1280 = vand.u32 %v71, 4294901760
    %1281 = vmatpush.msra.mxu0 %v1280
    %v1282 = vand.u32 %v70, 4294901760
    %1283 = vmatpush.msra.mxu0 %v1282
    %v1284 = vand.u32 %v69, 4294901760
    %1285 = vmatpush.msra.mxu0 %v1284
    %v1286 = vand.u32 %v68, 4294901760
    %1287 = vmatpush.msra.mxu0 %v1286
    %v1288 = vand.u32 %v67, 4294901760
    %1289 = vmatpush.msra.mxu0 %v1288
    %v1290 = vand.u32 %v66, 4294901760
    %1291 = vmatpush.msra.mxu0 %v1290
    %v1292 = vand.u32 %v65, 4294901760
    %1293 = vmatpush.msra.mxu0 %v1292
    %v1294 = vand.u32 %v64, 4294901760
    %1295 = vmatpush.msra.mxu0 %v1294
    %v1296 = vand.u32 %v958, 4294901760
    %1297 = vmatmul.f32.gmra.mxu0 %v1296
    %v1298 = vpop.f32.mrf.mxu0
    %v1299 = vadd.f32 %v1262, %v1298
    %1300 = vdwg.mxu0
    %vm1301 = vcmask 23552
    %1302 = vst.msk [vmem:[%s3] sm:$0xff] %vm1301, %v1299
    // Predicated region
    $region18: #{tpu_custom_call.1} parent=1 // pred_check
      _
    $region19: #{tpu_custom_call.1} parent=1 // pred_check_branch
      %1304 = sbr.rel (0) target = $region21
    $region20: #{tpu_custom_call.1} parent=1 // pred_region
      _
    $region21: #{tpu_custom_call.1} parent=1 // pred_fallthru
      _
    // Predicated region
    $region22: #{tpu_custom_call.1} parent=1 // pred_check
      _
    $region23: #{tpu_custom_call.1} parent=1 // pred_check_branch
      %1306 = sbr.rel (0) target = $region25
    $region24: #{tpu_custom_call.1} parent=1 // pred_region
      _
    $region25: #{tpu_custom_call.1} parent=1 // pred_fallthru
      _
    %1307 = vsyncpa [#allocation3], 1

</llo_original>
